<compile_context>
chip_gen: v7x
topology: tpu7x:2x2x1
jax: 0.10.0
libtpu: 0.0.40
codegen_flags: <defaults>
</compile_context>

<pallas_src>
import jax
import jax.numpy as jnp
from jax.experimental import pallas as pl
from jax.experimental.pallas import tpu as pltpu


def _make_kernel(actual_b: int, tile_b: int):
    """Build the kernel, closing over static batch / tile sizes."""
    ragged = (actual_b % tile_b) != 0

    def kernel(logits_ref, side_ref, partial_ref):
        x = logits_ref[...]                        # (tile_b, C) native dtype
        side = side_ref[...]                       # (tile_b, 3) f32 packed scalars
        cls = side[:, 0:1].astype(jnp.int32)       # class_value per row
        ineq = side[:, 1:2].astype(jnp.int32)      # inequality per row
        tgt = side[:, 2:3]                         # target per row (f32)

        tb, c = x.shape

        # One-hot column mask: exactly one True per (valid) row.
        col = jax.lax.broadcasted_iota(jnp.int32, (tb, c), 1)
        is_cls = col == cls

        # In-kernel gather of the class-column logit: select + lane reduce.
        # Only one column per row is selected, so the reduce is exact.
        xf = x.astype(jnp.float32)
        x_cls = jnp.sum(jnp.where(is_cls, xf, 0.0), axis=1, keepdims=True)

        # Sigmoid on only tile_b values (exact) — the dense sigmoid over the
        # full (tile_b, C) block is never computed.
        s = 1.0 / (1.0 + jnp.exp(-x_cls))
        diff = s - tgt                             # (tile_b, 1)

        keep = ((ineq == 1)
                | ((ineq == 2) & (diff > 0.0))
                | ((ineq == 3) & (diff < 0.0)))

        if ragged:
            # Mask out padded rows of the boundary tile (their VMEM contents
            # are unspecified; `where` is a select, so NaNs are safe).
            row = jax.lax.broadcasted_iota(jnp.int32, (tb, 1), 0)
            keep = keep & ((row + pl.program_id(0) * tile_b) < actual_b)

        loss = jnp.where(keep, diff * diff * jnp.abs(diff), 0.0)

        # Per-tile partial sum, broadcast over a full (8, 128) block so the
        # store is an unmasked, lane-dense vst. Final reduce happens outside.
        partial_ref[...] = jnp.zeros((8, 128), jnp.float32) + jnp.sum(loss)

    return kernel


def _choose_tile_b(batch: int, channels: int, itemsize: int) -> int:
    """Largest batch tile keeping one logits block ~2 MiB (x2 double-buffer)."""
    target_bytes = 2 * 1024 * 1024
    rows = target_bytes // max(1, channels * itemsize)
    rows = max(8, min(int(rows), 2048))
    rows = (rows // 8) * 8                      # (8, 128) sublane alignment
    if rows >= batch:
        return batch                            # single full-batch block
    return rows


def custom_mse(output, class_value, inequality, target, *, tile_b=None):
    """output: (B, C) float (any dtype); class_value/inequality: (B,) int;
    target: (B,) float. Returns the scalar f32 loss of CustomMSE.forward()."""
    B, C = output.shape

    if tile_b is None:
        tile_b = _choose_tile_b(B, C, jnp.dtype(output.dtype).itemsize)
    tile_b = min(int(tile_b), B)
    if tile_b < B:
        tile_b = max(8, (tile_b // 8) * 8)      # partial blocks need 8-row align
    num_tiles = pl.cdiv(B, tile_b)

    # Pack the three per-row scalars into one small f32 side array (one DMA
    # stream, one lane-padded VMEM block instead of three). Class indices and
    # inequality values are small ints -> exactly representable in f32.
    side = jnp.stack(
        [class_value.astype(jnp.float32),
         inequality.astype(jnp.float32),
         target.astype(jnp.float32)],
        axis=1)                                  # (B, 3)

    partials = pl.pallas_call(
        _make_kernel(B, tile_b),
        out_shape=jax.ShapeDtypeStruct((num_tiles * 8, 128), jnp.float32),
        grid=(num_tiles,),
        in_specs=[
            pl.BlockSpec((tile_b, C), lambda i: (i, 0)),   # logits, native dtype
            pl.BlockSpec((tile_b, 3), lambda i: (i, 0)),   # packed scalars
        ],
        out_specs=pl.BlockSpec((8, 128), lambda i: (i, 0)),
        compiler_params=pltpu.CompilerParams(
            dimension_semantics=("parallel",),             # megacore-shardable
            vmem_limit_bytes=32 * 1024 * 1024,
        ),
    )(output, side)

    # Each tile wrote its scalar broadcast over an (8, 128) block; pick one
    # representative per tile and reduce on the XLA side.
    return jnp.sum(partials.reshape(num_tiles, 8, 128)[:, 0, 0])


def _reference(output, class_value, inequality, target):
    """Pure-JAX reference of the PyTorch forward, for a sanity check."""
    B, C = output.shape
    s = jax.nn.sigmoid(output.astype(jnp.float32))
    t = jnp.broadcast_to(target.reshape(B, 1).astype(jnp.float32), (B, C))
    ineq_mask = jnp.zeros((B, C), jnp.int32).at[jnp.arange(B), class_value].set(
        inequality.astype(jnp.int32))
    diff = s - t
    sq = diff * diff
    w1 = (ineq_mask == 1).astype(jnp.float32)
    w2 = (ineq_mask == 2).astype(jnp.float32) * (diff > 0).astype(jnp.float32)
    w3 = (ineq_mask == 3).astype(jnp.float32) * (diff < 0).astype(jnp.float32)
    return jnp.sum((sq * w1 + sq * w2 + sq * w3) * jnp.abs(diff))


if __name__ == "__main__":
    key = jax.random.PRNGKey(0)
    k1, k2, k3, k4 = jax.random.split(key, 4)

    # Test 1: f32 logits, multi-tile grid with a ragged last tile
    # (B=20, tile_b=8 -> grid of 3, last tile only 4 valid rows).
    B, C = 20, 16
    output = jax.random.normal(k1, (B, C), dtype=jnp.float32)
    class_value = jax.random.randint(k2, (B,), 0, C, dtype=jnp.int32)
    inequality = jax.random.randint(k3, (B,), 1, 4, dtype=jnp.int32)  # {1,2,3}
    target = jax.random.uniform(k4, (B,), dtype=jnp.float32)

    loss = custom_mse(output, class_value, inequality, target, tile_b=8)
    loss = jax.block_until_ready(loss)
    ref = _reference(output, class_value, inequality, target)
    assert jnp.allclose(loss, ref, atol=1e-3, rtol=1e-3), (loss, ref)

    # Test 2: native bf16 logits (cast + gather happen in-kernel), auto tile.
    out_bf16 = output[:8].astype(jnp.bfloat16)
    loss2 = custom_mse(out_bf16, class_value[:8], inequality[:8], target[:8])
    loss2 = jax.block_until_ready(loss2)
    ref2 = _reference(out_bf16, class_value[:8], inequality[:8], target[:8])
    assert jnp.allclose(loss2, ref2, atol=1e-3, rtol=1e-3), (loss2, ref2)

    print("KERNEL_OK")
</pallas_src>

<mosaic_0001>
module attributes {stable_mosaic.version = 11 : i64} {
  func.func @kernel(%arg0: i32, %arg1: memref<8x16xf32, #tpu.memory_space<vmem>>, %arg2: memref<8x3xf32, #tpu.memory_space<vmem>>, %arg3: memref<8x128xf32, #tpu.memory_space<vmem>>) attributes {dimension_semantics = [#tpu.dimension_semantics<parallel>], iteration_bounds = array<i64: 3>, scalar_prefetch = 0 : i64, scratch_operands = 0 : i64, tpu.core_type = #tpu.core_type<tc>, window_params = [{transform_indices = @transform_0, window_bounds = array<i64: 8, 16>}, {transform_indices = @transform_1, window_bounds = array<i64: 8, 3>}, {transform_indices = @transform_2, window_bounds = array<i64: 8, 128>}]} {
    %c0 = arith.constant 0 : index
    %c0_0 = arith.constant 0 : index
    %0 = vector.load %arg1[%c0, %c0_0] : memref<8x16xf32, #tpu.memory_space<vmem>>, vector<8x16xf32>
    %c0_1 = arith.constant 0 : index
    %c0_2 = arith.constant 0 : index
    %1 = vector.load %arg2[%c0_1, %c0_2] : memref<8x3xf32, #tpu.memory_space<vmem>>, vector<8x3xf32>
    %2 = vector.extract_strided_slice %1 {offsets = [0, 0], sizes = [8, 1], strides = [1, 1]} : vector<8x3xf32> to vector<8x1xf32>
    %3 = arith.fptosi %2 : vector<8x1xf32> to vector<8x1xi32>
    %4 = vector.extract_strided_slice %1 {offsets = [0, 1], sizes = [8, 1], strides = [1, 1]} : vector<8x3xf32> to vector<8x1xf32>
    %5 = arith.fptosi %4 : vector<8x1xf32> to vector<8x1xi32>
    %6 = vector.extract_strided_slice %1 {offsets = [0, 2], sizes = [8, 1], strides = [1, 1]} : vector<8x3xf32> to vector<8x1xf32>
    %7 = tpu.iota {dimensions = array<i32: 1>} : vector<8x16xi32>
    %8 = vector.broadcast %3 : vector<8x1xi32> to vector<8x16xi32>
    %9 = arith.cmpi eq, %7, %8 : vector<8x16xi32>
    %cst = arith.constant 0.000000e+00 : f32
    %10 = vector.broadcast %cst : f32 to vector<8x16xf32>
    %11 = arith.select %9, %0, %10 : vector<8x16xi1>, vector<8x16xf32>
    %cst_3 = arith.constant dense<0.000000e+00> : vector<8xf32>
    %12 = vector.multi_reduction <add>, %11, %cst_3 [1] : vector<8x16xf32> to vector<8xf32>
    %13 = vector.shape_cast %12 : vector<8xf32> to vector<8x1xf32>
    %cst_4 = arith.constant 0.000000e+00 : f32
    %14 = vector.broadcast %cst_4 : f32 to vector<8x1xf32>
    %15 = arith.subf %14, %13 : vector<8x1xf32>
    %16 = math.exp %15 : vector<8x1xf32>
    %cst_5 = arith.constant 1.000000e+00 : f32
    %17 = vector.broadcast %cst_5 : f32 to vector<8x1xf32>
    %18 = arith.addf %17, %16 : vector<8x1xf32>
    %cst_6 = arith.constant 1.000000e+00 : f32
    %19 = vector.broadcast %cst_6 : f32 to vector<8x1xf32>
    %20 = arith.divf %19, %18 : vector<8x1xf32>
    %21 = arith.subf %20, %6 : vector<8x1xf32>
    %c1_i32 = arith.constant 1 : i32
    %22 = vector.broadcast %c1_i32 : i32 to vector<8x1xi32>
    %23 = arith.cmpi eq, %5, %22 : vector<8x1xi32>
    %c2_i32 = arith.constant 2 : i32
    %24 = vector.broadcast %c2_i32 : i32 to vector<8x1xi32>
    %25 = arith.cmpi eq, %5, %24 : vector<8x1xi32>
    %cst_7 = arith.constant 0.000000e+00 : f32
    %26 = vector.broadcast %cst_7 : f32 to vector<8x1xf32>
    %27 = arith.cmpf ogt, %21, %26 : vector<8x1xf32>
    %28 = arith.andi %25, %27 : vector<8x1xi1>
    %29 = arith.ori %23, %28 : vector<8x1xi1>
    %c3_i32 = arith.constant 3 : i32
    %30 = vector.broadcast %c3_i32 : i32 to vector<8x1xi32>
    %31 = arith.cmpi eq, %5, %30 : vector<8x1xi32>
    %cst_8 = arith.constant 0.000000e+00 : f32
    %32 = vector.broadcast %cst_8 : f32 to vector<8x1xf32>
    %33 = arith.cmpf olt, %21, %32 : vector<8x1xf32>
    %34 = arith.andi %31, %33 : vector<8x1xi1>
    %35 = arith.ori %29, %34 : vector<8x1xi1>
    %36 = tpu.iota {dimensions = array<i32: 0>} : vector<8x1xi32>
    %c8_i32 = arith.constant 8 : i32
    %37 = arith.muli %arg0, %c8_i32 : i32
    %38 = vector.broadcast %37 : i32 to vector<8x1xi32>
    %39 = arith.addi %36, %38 : vector<8x1xi32>
    %c20_i32 = arith.constant 20 : i32
    %40 = vector.broadcast %c20_i32 : i32 to vector<8x1xi32>
    %41 = arith.cmpi slt, %39, %40 : vector<8x1xi32>
    %42 = arith.andi %35, %41 : vector<8x1xi1>
    %43 = arith.mulf %21, %21 : vector<8x1xf32>
    %44 = math.absf %21 : vector<8x1xf32>
    %45 = arith.mulf %43, %44 : vector<8x1xf32>
    %cst_9 = arith.constant 0.000000e+00 : f32
    %46 = vector.broadcast %cst_9 : f32 to vector<8x1xf32>
    %47 = arith.select %42, %45, %46 : vector<8x1xi1>, vector<8x1xf32>
    %cst_10 = arith.constant 0.000000e+00 : f32
    %48 = vector.broadcast %cst_10 : f32 to vector<8x128xf32>
    %49 = vector.shape_cast %47 : vector<8x1xf32> to vector<1x8x1xf32>
    %cst_11 = arith.constant dense<0.000000e+00> : vector<1xf32>
    %50 = vector.multi_reduction <add>, %49, %cst_11 [1, 2] : vector<1x8x1xf32> to vector<1xf32>
    %51 = vector.shape_cast %50 : vector<1xf32> to vector<1x1x1xf32>
    %52 = vector.extract %51[0, 0, 0] : f32 from vector<1x1x1xf32>
    %53 = vector.broadcast %52 : f32 to vector<8x128xf32>
    %54 = arith.addf %48, %53 : vector<8x128xf32>
    %c0_12 = arith.constant 0 : index
    %c0_13 = arith.constant 0 : index
    %55 = vector.load %arg3[%c0_12, %c0_13] : memref<8x128xf32, #tpu.memory_space<vmem>>, vector<8x128xf32>
    tpu.vector_store %arg3[%c0_12, %c0_13], %54 {strides = array<i32>} : memref<8x128xf32, #tpu.memory_space<vmem>>, vector<8x128xf32>,
    return
  }
  func.func @transform_0(%arg0: i32) -> (i32, i32) {
    %c0_i32 = arith.constant 0 : i32
    %c0_i32_0 = arith.constant 0 : i32
    return %arg0, %c0_i32 : i32, i32
  }
  func.func @transform_1(%arg0: i32) -> (i32, i32) {
    %c0_i32 = arith.constant 0 : i32
    %c0_i32_0 = arith.constant 0 : i32
    return %arg0, %c0_i32 : i32, i32
  }
  func.func @transform_2(%arg0: i32) -> (i32, i32) {
    %c0_i32 = arith.constant 0 : i32
    %c0_i32_0 = arith.constant 0 : i32
    return %arg0, %c0_i32 : i32, i32
  }
}

</mosaic_0001>

<llo_original>
// kernel: tpu_custom_call.1
$region0: #{tpu_custom_call.1}
  #allocation0 [shape = 'u32[]', space=smem, size = 0x4, offset = 0x4, fixed_abs, tag = 'smem constant byte address 0x4 - core index']
  #allocation1 [shape = 'u32[144,128]{1,0:T(1,128)}', space=vmem, size = 0x12000, scoped, tag = 'internal scratch']
  %s0 = inlined_call_operand.vmem [shape: f32[20,16], index: 0, kind: input, shape index: {}]
  %s1 = inlined_call_operand.vmem [shape: f32[20,3], index: 1, kind: input, shape index: {}]
  %s2 = inlined_call_operand.hbm [shape: f32[24,128], index: 2, kind: output, shape index: {}]
  %s3 = sld [smem:[#allocation0]]
  $region41: #{tpu_custom_call.1} parent=0
    _
  %s5 = ssub.s32 1, %s3
  %s6 = scalar_select 0, %s5, %s3
  $region1: #{tpu_custom_call.1} parent=0
    #allocation2 [shape = 'u8[8192]{0}', space=vmem, size = 0x2000, scoped, tag = 'output window, operand 0']
    #allocation3 [shape = 's32[2]{0}', space=sflag, size = 0x8, scoped, tag = 'scoped memory for tpu_custom_call.1']
    %7 = vsyncpa [#allocation3], 0
    %s8 = scalar_lea.sflag [#allocation3], 1
    %9 = vsyncpa %s8, 0
    loop: start=0, step=1, limit=5
    $region2: #{tpu_custom_call.1} parent=1 // loop_pre_header
      _
    $region3: #{tpu_custom_call.1} parent=1 // loop_header
      %s11 = sphi 0, %s15
      %p12 = scmp.ge.s32.totalorder %s11, 5
      %s21 = sphi 0, %s23
      %s24 = sphi 0, %s21
      %s25 = sphi 0, %s24
      %s41 = sphi 0, %s25
      %s47 = sphi 0, %s49
      %s50 = sphi 0, %s47
      %s51 = sphi 0, %s50
      %s67 = sphi 0, %s51
      %s73 = sphi 0, %s75
      %s76 = sphi 0, %s73
      %s77 = sphi 0, %s76
      %s93 = sphi 0, %s77
    $region4: #{tpu_custom_call.1} parent=1 // loop_header_branch
      %14 = sbr.rel (%p12) target = $region8
    $region5: #{tpu_custom_call.1} parent=1 // loop_body
      %s16 = ssub.s32 %s11, 1
      %s17 = ssub.s32 %s11, 2
      %s18 = sadd.s32 %s11, 1
      %s19 = ssub.s32 %s11, %s18
      %p20 = scmp.eq.s32.totalorder %s19, 0
      %s22 = sadd.s32 %s21, 1
      %s23 = scalar_select %p20, %s21, %s22
      %p26 = pneg %p20
      %p27 = scmp.eq.s32.totalorder %s11, 2
      %p28 = por %p26, %p27
      %p29 = scmp.ne.s32.totalorder %s21, %s24
      %p30 = scmp.eq.s32.totalorder %s11, 0
      %p31 = por %p29, %p30
      %p32 = scmp.ne.s32.totalorder %s21, %s24
      %p33 = scmp.eq.s32.totalorder %s16, 2
      %p34 = por %p32, %p33
      %p35 = scmp.ne.s32.totalorder %s24, %s25
      %p36 = scmp.eq.s32.totalorder %s16, 0
      %p37 = por %p35, %p36
      %p38 = scmp.ne.s32.totalorder %s24, %s25
      %p39 = scmp.eq.s32.totalorder %s17, 2
      %p40 = por %p38, %p39
      %p42 = scmp.ne.s32.totalorder %s25, %s41
      %p43 = scmp.eq.s32.totalorder %s17, 0
      %p44 = por %p42, %p43
      %s45 = ssub.s32 %s11, %s18
      %p46 = scmp.eq.s32.totalorder %s45, 0
      %s48 = sadd.s32 %s47, 1
      %s49 = scalar_select %p46, %s47, %s48
      %p52 = pneg %p46
      %p53 = scmp.eq.s32.totalorder %s11, 2
      %p54 = por %p52, %p53
      %p55 = scmp.ne.s32.totalorder %s47, %s50
      %p56 = scmp.eq.s32.totalorder %s11, 0
      %p57 = por %p55, %p56
      %p58 = scmp.ne.s32.totalorder %s47, %s50
      %p59 = scmp.eq.s32.totalorder %s16, 2
      %p60 = por %p58, %p59
      %p61 = scmp.ne.s32.totalorder %s50, %s51
      %p62 = scmp.eq.s32.totalorder %s16, 0
      %p63 = por %p61, %p62
      %p64 = scmp.ne.s32.totalorder %s50, %s51
      %p65 = scmp.eq.s32.totalorder %s17, 2
      %p66 = por %p64, %p65
      %p68 = scmp.ne.s32.totalorder %s51, %s67
      %p69 = scmp.eq.s32.totalorder %s17, 0
      %p70 = por %p68, %p69
      %s71 = ssub.s32 %s11, %s18
      %p72 = scmp.eq.s32.totalorder %s71, 0
      %s74 = sadd.s32 %s73, 1
      %s75 = scalar_select %p72, %s73, %s74
      %p78 = pneg %p72
      %p79 = scmp.eq.s32.totalorder %s11, 2
      %p80 = por %p78, %p79
      %p81 = scmp.ne.s32.totalorder %s73, %s76
      %p82 = scmp.eq.s32.totalorder %s11, 0
      %p83 = por %p81, %p82
      %p84 = scmp.ne.s32.totalorder %s73, %s76
      %p85 = scmp.eq.s32.totalorder %s16, 2
      %p86 = por %p84, %p85
      %p87 = scmp.ne.s32.totalorder %s76, %s77
      %p88 = scmp.eq.s32.totalorder %s16, 0
      %p89 = por %p87, %p88
      %p90 = scmp.ne.s32.totalorder %s76, %s77
      %p91 = scmp.eq.s32.totalorder %s17, 2
      %p92 = por %p90, %p91
      %p94 = scmp.ne.s32.totalorder %s77, %s93
      %p95 = scmp.eq.s32.totalorder %s17, 0
      %p96 = por %p94, %p95
      %p97 = scmp.le.s32.totalorder 1, %s11
      %p98 = scmp.lt.s32.totalorder %s11, 4
      %p99 = pnand %p97, %p98
      %p100 = pneg %p99
      // Predicated region
      $region9: #{tpu_custom_call.1} parent=5 // pred_check
        _
      $region10: #{tpu_custom_call.1} parent=5 // pred_check_branch
        %102 = sbr.rel (%p99) target = $region12
      $region11: #{tpu_custom_call.1} parent=5 // pred_region
        %s103 = ssub.s32 %s11, 1
      $region12: #{tpu_custom_call.1} parent=5 // pred_fallthru
        _
      %p104 = scmp.lt.s32.totalorder %s11, 3
      // Predicated region
      $region13: #{tpu_custom_call.1} parent=5 // pred_check
        %p105 = pneg %p104
      $region14: #{tpu_custom_call.1} parent=5 // pred_check_branch
        %107 = sbr.rel (%p105) target = $region16
      $region15: #{tpu_custom_call.1} parent=5 // pred_region
        // Predicated region
        $region17: #{tpu_custom_call.1} parent=15 // pred_check
          %p108 = pneg %p31
        $region18: #{tpu_custom_call.1} parent=15 // pred_check_branch
          %110 = sbr.rel (%p108) target = $region20
        $region19: #{tpu_custom_call.1} parent=15 // pred_region
          %p111 = scmp.lt.s32.totalorder %s11, 2
          %s112 = scalar_select %p111, %s11, 2
          %s113 = smul.addr %s112, 8
          %s114 = scalar_lea.vmem %s0, %s113
        $region20: #{tpu_custom_call.1} parent=15 // pred_fallthru
          _
        // Predicated region
        $region21: #{tpu_custom_call.1} parent=15 // pred_check
          %p115 = pneg %p57
        $region22: #{tpu_custom_call.1} parent=15 // pred_check_branch
          %117 = sbr.rel (%p115) target = $region24
        $region23: #{tpu_custom_call.1} parent=15 // pred_region
          %p118 = scmp.lt.s32.totalorder %s11, 2
          %s119 = scalar_select %p118, %s11, 2
          %s120 = smul.addr %s119, 8
          %s121 = scalar_lea.vmem %s1, %s120
        $region24: #{tpu_custom_call.1} parent=15 // pred_fallthru
          _
      $region16: #{tpu_custom_call.1} parent=5 // pred_fallthru
        _
      %p122 = scmp.le.s32.totalorder 1, %s11
      %p123 = scmp.lt.s32.totalorder %s11, 4
      %p124 = pnand %p122, %p123
      %p125 = pneg %p124
      // Predicated region
      $region25: #{tpu_custom_call.1} parent=5 // pred_check
        _
      $region26: #{tpu_custom_call.1} parent=5 // pred_check_branch
        %127 = sbr.rel (%p124) target = $region28
      $region27: #{tpu_custom_call.1} parent=5 // pred_region
        %s128 = ssub.s32 %s11, 1
        %p129 = scmp.lt.s32.totalorder %s16, 2
        %s130 = scalar_select %p129, %s16, 2
        %s131 = smul.addr %s130, 8
        %s132 = scalar_lea.vmem %s0, %s131
        %p133 = pneg %p37
        %p134 = pneg %p34
        %p135 = scmp.lt.s32.totalorder %s16, 2
        %s136 = scalar_select %p135, %s16, 2
        %s137 = smul.addr %s136, 8
        %s138 = scalar_lea.vmem %s1, %s137
        %p139 = pneg %p63
        %p140 = pneg %p60
        %p141 = pneg %p89
        %p142 = pneg %p86
        %s143 = sand.u32 %s76, 1
        %s144 = scalar_lea.sflag [#allocation3], %s143
        %s145 = sand.u32 %s76, 1
        %s146 = smul.addr %s145, 8
        %s147 = scalar_lea.vmem [#allocation2], %s146
        %p148 = scmp.lt.s32.totalorder %s16, 2
        %s149 = scalar_select %p148, %s16, 2
        %s150 = smul.addr %s149, 8
        %s151 = scalar_lea.vmem %s0, %s150
        %p152 = scmp.lt.s32.totalorder %s16, 2
        %s153 = scalar_select %p152, %s16, 2
        %s154 = smul.addr %s153, 8
        %s155 = scalar_lea.vmem %s1, %s154
        %v156 = vld [vmem:[%s151] sm:$0xff]
        %v157 = vld [vmem:[%s155] sm:$0xff]
        %v158 = vcvt.f32.s32.to.zero.pseudo %v157
        %v159 = vlaneseq
        %v160 = vand.u32 %v159, 127
        %161 = vset.pattern.permute.xlu0 0
        %162 = vperm.xlu0 %161, %v158
        %v163 = vpop.permute.xlu0 %162
        %vm164 = vcmp.eq.s32.totalorder %v160, %v163
        %v165 = vsel %vm164, %v156, 0.0
        %vm166 = vcmask 130048
        %v167 = vsel %vm166, %v165, 0.0
        %168 = vadd.xlane.f32.xlu0 %v167
        %v169 = vpop.xlane.xlu0 %168
        %v170 = vsub.f32 0.0, %v169
        %v171 = vmul.f32 %v170, 1.442695
        %v172 = vpow.pop %v171
        %v173 = vadd.f32 %v172, 1.0
        %v174 = vrcp.pop %v173
        %v175 = vmul.f32 1.0, %v174
        %v176 = vsub.f32 %v175, %v157
        %vm177 = vcmp.eq.s32.totalorder %v158, 1
        %vm178 = vcmp.eq.s32.totalorder %v158, 2
        %vm179 = vcmp.gt.f32.partialorder %v176, 0.0
        %v180 = vsel %vm179, 1, 0
        %181 = vrot.lane.b32.xlu0 %v180, 127
        %v182 = vpop.permute.xlu0 %181
        %vm183 = vcmp.ne.s32.totalorder %v182, 0
        %vm184 = vmand %vm178, %vm183
        %vm185 = vmor %vm177, %vm184
        %vm186 = vcmp.eq.s32.totalorder %v158, 3
        %vm187 = vcmp.lt.f32.partialorder %v176, 0.0
        %v188 = vsel %vm187, 1, 0
        %189 = vrot.lane.b32.xlu0 %v188, 127
        %v190 = vpop.permute.xlu0 %189
        %vm191 = vcmp.ne.s32.totalorder %v190, 0
        %vm192 = vmand %vm186, %vm191
        %vm193 = vmor %vm185, %vm192
        %v194 = vlaneseq
        %v195 = vshrl.u32 %v194, 7
        %s196 = smul.u32 %s16, 8
        %v197 = vstv %s196
        %v198 = vadd.s32 %v195, %v197
        %vm199 = vcmp.lt.s32.totalorder %v198, 20
        %vm200 = vmand %vm193, %vm199
        %v201 = vmul.f32 %v176, %v176
        %v202 = vand.u32 2147483647, %v176
        %v203 = vmul.f32 %v201, %v202
        %205 = vrot.lane.b32.xlu0 %v203, 127
        %v206 = vpop.permute.xlu0 %205
        %v208 = vsel %vm200, %v206, 0.0
        %210 = vrot.lane.b32.xlu0 %v208, 127
        %v211 = vpop.permute.xlu0 %210
        %vm213 = vcmask 7168
        %v214 = vsel %vm213, %v211, 0.0
        %215 = vadd.xlane.f32.xlu0 %v214
        %v216 = vpop.xlane.xlu0 %215
        %v217 = vrot.slane %v216, 4
        %v218 = vadd.f32 %v216, %v217
        %v219 = vrot.slane %v218, 2
        %v220 = vadd.f32 %v218, %v219
        %v221 = vrot.slane %v220, 1
        %v222 = vadd.f32 %v220, %v221
        %s223 = vtos %v222
        %v224 = vstv %s223
        %v225 = vadd.f32 %v224, 0.0
        %226 = vst [vmem:[%s147] sm:$0xff] %v225
        %s227 = sand.u32 %s76, 1
        %s228 = scalar_lea.sflag [#allocation3], %s227
        %s229 = sand.u32 %s76, 1
        %s230 = smul.addr %s229, 8
        %s231 = scalar_lea.vmem [#allocation2], %s230
        // Predicated region
        $region29: #{tpu_custom_call.1} parent=27 // pred_check
          %p232 = pneg %p86
        $region30: #{tpu_custom_call.1} parent=27 // pred_check_branch
          %234 = sbr.rel (%p232) target = $region32
        $region31: #{tpu_custom_call.1} parent=27 // pred_region
          %s236 = ssub.s32 128, 128
          %237 = vsyncadd %s228, %s236
          %s238 = smul.addr %s16, 128
          %s239 = scalar_lea.hbm %s2, %s238
          %s241 = sshll.u32 %s231, 4
          %s242 = int_to_ptr.vmem [resolvable:$true] %s241
          %244 = dma.vmem_to_hbm [thread:$0]  %s242, 128, %s239, %s228
        $region32: #{tpu_custom_call.1} parent=27 // pred_fallthru
          _
      $region28: #{tpu_custom_call.1} parent=5 // pred_fallthru
        _
      %p245 = scmp.le.s32.totalorder 2, %s11
      // Predicated region
      $region33: #{tpu_custom_call.1} parent=5 // pred_check
        %p246 = pneg %p245
      $region34: #{tpu_custom_call.1} parent=5 // pred_check_branch
        %248 = sbr.rel (%p246) target = $region36
      $region35: #{tpu_custom_call.1} parent=5 // pred_region
        %s249 = ssub.s32 %s11, 2
        // Predicated region
        $region37: #{tpu_custom_call.1} parent=35 // pred_check
          %p250 = pneg %p92
        $region38: #{tpu_custom_call.1} parent=35 // pred_check_branch
          %252 = sbr.rel (%p250) target = $region40
        $region39: #{tpu_custom_call.1} parent=35 // pred_region
          %s253 = sand.u32 %s77, 1
          %s254 = scalar_lea.sflag [#allocation3], %s253
          %s255 = sand.u32 %s77, 1
          %s256 = smul.addr %s255, 8
          %s257 = scalar_lea.vmem [#allocation2], %s256
          %258 = dma.done %s254, 128
        $region40: #{tpu_custom_call.1} parent=35 // pred_fallthru
          _
      $region36: #{tpu_custom_call.1} parent=5 // pred_fallthru
        _
    $region6: #{tpu_custom_call.1} parent=1 // loop_footer
      %s15 = sadd.s32 1, %s11
    $region7: #{tpu_custom_call.1} parent=1 // loop_footer_branch
      %10 = sbr.rel target = $region3
    $region8: #{tpu_custom_call.1} parent=1 // loop_exit
      _
    %259 = vsyncpa [#allocation3], 1
    %s260 = scalar_lea.sflag [#allocation3], 1
    %261 = vsyncpa %s260, 1

</llo_original>
